<compile_context>
chip_gen: v7x
topology: tpu7x:2x2x1
jax: 0.10.0
libtpu: 0.0.40
codegen_flags: <defaults>
</compile_context>

<pallas_src>
import jax
import jax.numpy as jnp
from jax import lax
from jax.experimental import pallas as pl
from jax.experimental.pallas import tpu as pltpu


def basic_block_kernel(x_ref, bm1_ref, s1_ref, b1_ref, bm2_ref, s2_ref, b2_ref,
                       out_ref):
    # x_ref   : (1, H, W*C) f32    one batch element, (w, c) folded onto lanes
    # bm*_ref : (W*C, 3*W*C) bf16  block-banded conv weights (3 vertical taps)
    # s*/b*   : (1, W*C) f32       folded BN scale / bias, tiled over w
    # out_ref : (1, H, W*C) f32
    H = out_ref.shape[1]
    WC = out_ref.shape[2]
    zero_row = jnp.zeros((1, WC), jnp.float32)

    def conv3x3(inp_f32, bm_ref):
        # One lane-dense MXU matmul: (H, WC) @ (WC, 3*WC), bf16 in / f32 acc.
        a = jnp.dot(inp_f32.astype(jnp.bfloat16), bm_ref[...],
                    preferred_element_type=jnp.float32)          # (H, 3*WC)
        # Column block dh is the contribution of vertical tap dh (horizontal
        # taps + horizontal zero-pad already live in the band matrix).  The
        # lane slices below are 128-aligned; the vertical taps become +/-1-row
        # shifted adds against a zero halo row.
        a0 = a[:, :WC]
        a1 = a[:, WC:2 * WC]
        a2 = a[:, 2 * WC:]
        return (a1
                + jnp.concatenate([zero_row, a0[:H - 1, :]], axis=0)
                + jnp.concatenate([a2[1:, :], zero_row], axis=0))

    x = x_ref[0]                                                 # (H, WC) f32
    # conv1 -> bn1 -> relu
    y = jnp.maximum(conv3x3(x, bm1_ref) * s1_ref[...] + b1_ref[...], 0.0)
    # conv2 -> bn2 -> (+identity) -> relu ; full-lane-width store
    z = conv3x3(y, bm2_ref)
    out = jnp.maximum(z * s2_ref[...] + b2_ref[...] + x, 0.0)
    out_ref[0] = out.astype(out_ref.dtype)


def _conv_band_matrix(wt, width):
    """HWIO 3x3 weights -> (width*Cin, 3*width*Cout) block-banded matrix.

    Column block dh (of width width*Cout) satisfies
        M_dh[(w+dw-1)*Cin + ci, w*Cout + co] = wt[dh, dw, ci, co]
    (zero where w+dw-1 is out of range), so for rows flattened as (w, c):
        conv_out[h] = sum_dh rows_in[h + dh - 1] @ M_dh       (zero halo rows)
    reproduces a 3x3 / stride 1 / padding 1 convolution.
    """
    blocks = []
    for dh in range(3):
        m = jnp.zeros((width * wt.shape[2], width * wt.shape[3]), wt.dtype)
        for dw in range(3):
            # shift[src, w] = 1  iff  src == w + dw - 1   (h-tap + h-padding)
            shift = jnp.eye(width, k=1 - dw, dtype=wt.dtype)
            m = m + jnp.kron(shift, wt[dh, dw])
        blocks.append(m)
    return jnp.concatenate(blocks, axis=1)


@jax.jit
def basic_block_forward(x_nchw, w1, g1, be1, m1, v1, w2, g2, be2, m2, v2,
                        eps=1e-5):
    """x_nchw: (N, C, H, W) f32; conv weights HWIO. Returns NCHW."""
    N, C, H, W = x_nchw.shape
    kh, kw, cin, planes = w1.shape
    assert (kh, kw) == (3, 3) and cin == C
    assert C == planes, "downsample=None requires inplanes == planes"
    WC = W * C

    # NCHW -> (N, H, W*C): channels folded into the lane axis (glue only).
    x_rows = jnp.transpose(x_nchw, (0, 2, 3, 1)).reshape(N, H, WC)

    # Fold inference-mode BN into scale/bias, tiled over w so they broadcast
    # against the (w, c)-flattened lane axis.
    inv1 = g1 * lax.rsqrt(v1 + eps)
    inv2 = g2 * lax.rsqrt(v2 + eps)
    s1 = jnp.tile(inv1, W).reshape(1, WC)
    b1 = jnp.tile(be1 - m1 * inv1, W).reshape(1, WC)
    s2 = jnp.tile(inv2, W).reshape(1, WC)
    b2 = jnp.tile(be2 - m2 * inv2, W).reshape(1, WC)

    # Weight repack: 3x3 conv -> block-banded matmul weights, bf16 for the MXU.
    bm1 = _conv_band_matrix(w1, W).astype(jnp.bfloat16)   # (WC, 3*WC)
    bm2 = _conv_band_matrix(w2, W).astype(jnp.bfloat16)   # (WC, 3*WC)

    out_rows = pl.pallas_call(
        basic_block_kernel,
        out_shape=jax.ShapeDtypeStruct((N, H, WC), jnp.float32),
        grid_spec=pltpu.PrefetchScalarGridSpec(
            num_scalar_prefetch=0,
            grid=(N,),
            in_specs=[
                pl.BlockSpec((1, H, WC), lambda n: (n, 0, 0)),     # x rows
                pl.BlockSpec((WC, 3 * WC), lambda n: (0, 0)),      # bm1
                pl.BlockSpec((1, WC), lambda n: (0, 0)),           # s1
                pl.BlockSpec((1, WC), lambda n: (0, 0)),           # b1
                pl.BlockSpec((WC, 3 * WC), lambda n: (0, 0)),      # bm2
                pl.BlockSpec((1, WC), lambda n: (0, 0)),           # s2
                pl.BlockSpec((1, WC), lambda n: (0, 0)),           # b2
            ],
            out_specs=pl.BlockSpec((1, H, WC), lambda n: (n, 0, 0)),
        ),
        compiler_params=pltpu.CompilerParams(
            dimension_semantics=("parallel",),
            vmem_limit_bytes=32 * 1024 * 1024),
    )(x_rows, bm1, s1, b1, bm2, s2, b2)

    return jnp.transpose(out_rows.reshape(N, H, W, C), (0, 3, 1, 2))


def reference_forward(x_nchw, w1, g1, be1, m1, v1, w2, g2, be2, m2, v2,
                      eps=1e-5, quantize_bf16=False):
    """Pure-JAX reference (lax.conv). With quantize_bf16=True the conv operands
    are rounded to bf16 (accumulation stays f32), matching the kernel's MXU
    operand precision; the residual stays f32 in both."""
    def q(t):
        if quantize_bf16:
            return t.astype(jnp.bfloat16).astype(jnp.float32)
        return t

    x = jnp.transpose(x_nchw, (0, 2, 3, 1))
    dn = ('NHWC', 'HWIO', 'NHWC')
    y = lax.conv_general_dilated(q(x), q(w1), (1, 1), 'SAME',
                                 dimension_numbers=dn)
    y = (y - m1) / jnp.sqrt(v1 + eps) * g1 + be1
    y = jnp.maximum(y, 0.0)
    y = lax.conv_general_dilated(q(y), q(w2), (1, 1), 'SAME',
                                 dimension_numbers=dn)
    y = (y - m2) / jnp.sqrt(v2 + eps) * g2 + be2
    y = jnp.maximum(y + x, 0.0)
    return jnp.transpose(y, (0, 3, 1, 2))


if __name__ == "__main__":
    # N=2, inplanes=planes=8, H=W=16  ->  W*C = 128 (exactly one lane width).
    N, C, H, W = 2, 8, 16, 16
    planes = C

    key = jax.random.PRNGKey(0)
    ks = jax.random.split(key, 11)
    x = jax.random.normal(ks[0], (N, C, H, W), jnp.float32)
    w1 = jax.random.normal(ks[1], (3, 3, C, planes), jnp.float32) * 0.1
    w2 = jax.random.normal(ks[2], (3, 3, planes, planes), jnp.float32) * 0.1
    g1 = jax.random.uniform(ks[3], (planes,), jnp.float32, 0.5, 1.5)
    be1 = jax.random.normal(ks[4], (planes,), jnp.float32) * 0.1
    m1 = jax.random.normal(ks[5], (planes,), jnp.float32) * 0.1
    v1 = jax.random.uniform(ks[6], (planes,), jnp.float32, 0.5, 1.5)
    g2 = jax.random.uniform(ks[7], (planes,), jnp.float32, 0.5, 1.5)
    be2 = jax.random.normal(ks[8], (planes,), jnp.float32) * 0.1
    m2 = jax.random.normal(ks[9], (planes,), jnp.float32) * 0.1
    v2 = jax.random.uniform(ks[10], (planes,), jnp.float32, 0.5, 1.5)

    args = (x, w1, g1, be1, m1, v1, w2, g2, be2, m2, v2)
    out = jax.block_until_ready(basic_block_forward(*args))

    # Structural check: reference with the same bf16 operand rounding (f32
    # accumulation in both) -> must agree tightly.
    ref_bf16 = jax.block_until_ready(
        reference_forward(*args, quantize_bf16=True))
    # Sanity bound vs the pure-f32 module semantics (bf16 quantization noise).
    ref_f32 = jax.block_until_ready(reference_forward(*args))

    assert out.shape == (N, C, H, W)
    err_tight = float(jnp.max(jnp.abs(out - ref_bf16)))
    err_f32 = float(jnp.max(jnp.abs(out - ref_f32)))
    assert jnp.allclose(out, ref_bf16, atol=2e-2, rtol=1e-2), err_tight
    assert jnp.allclose(out, ref_f32, atol=5e-2, rtol=5e-2), err_f32
    print("KERNEL_OK")
</pallas_src>

<mosaic_0001>
module attributes {stable_mosaic.version = 11 : i64} {
  func.func @basic_block_kernel(%arg0: i32, %arg1: memref<1x16x128xf32, #tpu.memory_space<vmem>>, %arg2: memref<128x384xbf16, #tpu.memory_space<vmem>>, %arg3: memref<1x128xf32, #tpu.memory_space<vmem>>, %arg4: memref<1x128xf32, #tpu.memory_space<vmem>>, %arg5: memref<128x384xbf16, #tpu.memory_space<vmem>>, %arg6: memref<1x128xf32, #tpu.memory_space<vmem>>, %arg7: memref<1x128xf32, #tpu.memory_space<vmem>>, %arg8: memref<1x16x128xf32, #tpu.memory_space<vmem>>) attributes {dimension_semantics = [#tpu.dimension_semantics<parallel>], iteration_bounds = array<i64: 2>, scalar_prefetch = 0 : i64, scratch_operands = 0 : i64, tpu.core_type = #tpu.core_type<tc>, window_params = [{transform_indices = @transform_0, window_bounds = array<i64: 1, 16, 128>}, {pipeline_mode = #tpu.pipeline_mode<synchronous>, transform_indices = @transform_1, window_bounds = array<i64: 128, 384>}, {pipeline_mode = #tpu.pipeline_mode<synchronous>, transform_indices = @transform_2, window_bounds = array<i64: 1, 128>}, {pipeline_mode = #tpu.pipeline_mode<synchronous>, transform_indices = @transform_3, window_bounds = array<i64: 1, 128>}, {pipeline_mode = #tpu.pipeline_mode<synchronous>, transform_indices = @transform_4, window_bounds = array<i64: 128, 384>}, {pipeline_mode = #tpu.pipeline_mode<synchronous>, transform_indices = @transform_5, window_bounds = array<i64: 1, 128>}, {pipeline_mode = #tpu.pipeline_mode<synchronous>, transform_indices = @transform_6, window_bounds = array<i64: 1, 128>}, {transform_indices = @transform_7, window_bounds = array<i64: 1, 16, 128>}]} {
    %cst = arith.constant 0.000000e+00 : f32
    %0 = vector.broadcast %cst : f32 to vector<1x128xf32>
    %c0 = arith.constant 0 : index
    %c0_0 = arith.constant 0 : index
    %c0_1 = arith.constant 0 : index
    %1 = vector.load %arg1[%c0, %c0_0, %c0_1] : memref<1x16x128xf32, #tpu.memory_space<vmem>>, vector<1x16x128xf32>
    %2 = vector.shape_cast %1 : vector<1x16x128xf32> to vector<16x128xf32>
    %3 = arith.truncf %2 : vector<16x128xf32> to vector<16x128xbf16>
    %c0_2 = arith.constant 0 : index
    %c0_3 = arith.constant 0 : index
    %4 = vector.load %arg2[%c0_2, %c0_3] : memref<128x384xbf16, #tpu.memory_space<vmem>>, vector<128x384xbf16>
    %cst_4 = arith.constant dense<0.000000e+00> : vector<16x384xf32>
    %5 = tpu.matmul %3, %4, %cst_4 {dimension_numbers = #tpu.dot_dimension_numbers<[1], [0], [0], [1], [0, 0, 1, 1], [], []>} : vector<16x128xbf16>, vector<128x384xbf16>, vector<16x384xf32> -> vector<16x384xf32>
    %6 = vector.extract_strided_slice %5 {offsets = [0, 0], sizes = [16, 128], strides = [1, 1]} : vector<16x384xf32> to vector<16x128xf32>
    %7 = vector.extract_strided_slice %5 {offsets = [0, 128], sizes = [16, 128], strides = [1, 1]} : vector<16x384xf32> to vector<16x128xf32>
    %8 = vector.extract_strided_slice %5 {offsets = [0, 256], sizes = [16, 128], strides = [1, 1]} : vector<16x384xf32> to vector<16x128xf32>
    %9 = vector.extract_strided_slice %6 {offsets = [0, 0], sizes = [15, 128], strides = [1, 1]} : vector<16x128xf32> to vector<15x128xf32>
    %10 = tpu.concatenate %0, %9 in 0 : vector<1x128xf32>, vector<15x128xf32> -> vector<16x128xf32>
    %11 = arith.addf %7, %10 : vector<16x128xf32>
    %12 = vector.extract_strided_slice %8 {offsets = [1, 0], sizes = [15, 128], strides = [1, 1]} : vector<16x128xf32> to vector<15x128xf32>
    %13 = tpu.concatenate %12, %0 in 0 : vector<15x128xf32>, vector<1x128xf32> -> vector<16x128xf32>
    %14 = arith.addf %11, %13 : vector<16x128xf32>
    %c0_5 = arith.constant 0 : index
    %c0_6 = arith.constant 0 : index
    %15 = vector.load %arg3[%c0_5, %c0_6] : memref<1x128xf32, #tpu.memory_space<vmem>>, vector<1x128xf32>
    %16 = vector.broadcast %15 : vector<1x128xf32> to vector<16x128xf32>
    %17 = arith.mulf %14, %16 : vector<16x128xf32>
    %c0_7 = arith.constant 0 : index
    %c0_8 = arith.constant 0 : index
    %18 = vector.load %arg4[%c0_7, %c0_8] : memref<1x128xf32, #tpu.memory_space<vmem>>, vector<1x128xf32>
    %19 = vector.broadcast %18 : vector<1x128xf32> to vector<16x128xf32>
    %20 = arith.addf %17, %19 : vector<16x128xf32>
    %cst_9 = arith.constant 0.000000e+00 : f32
    %21 = vector.broadcast %cst_9 : f32 to vector<16x128xf32>
    %22 = arith.maximumf %20, %21 : vector<16x128xf32>
    %23 = arith.truncf %22 : vector<16x128xf32> to vector<16x128xbf16>
    %c0_10 = arith.constant 0 : index
    %c0_11 = arith.constant 0 : index
    %24 = vector.load %arg5[%c0_10, %c0_11] : memref<128x384xbf16, #tpu.memory_space<vmem>>, vector<128x384xbf16>
    %cst_12 = arith.constant dense<0.000000e+00> : vector<16x384xf32>
    %25 = tpu.matmul %23, %24, %cst_12 {dimension_numbers = #tpu.dot_dimension_numbers<[1], [0], [0], [1], [0, 0, 1, 1], [], []>} : vector<16x128xbf16>, vector<128x384xbf16>, vector<16x384xf32> -> vector<16x384xf32>
    %26 = vector.extract_strided_slice %25 {offsets = [0, 0], sizes = [16, 128], strides = [1, 1]} : vector<16x384xf32> to vector<16x128xf32>
    %27 = vector.extract_strided_slice %25 {offsets = [0, 128], sizes = [16, 128], strides = [1, 1]} : vector<16x384xf32> to vector<16x128xf32>
    %28 = vector.extract_strided_slice %25 {offsets = [0, 256], sizes = [16, 128], strides = [1, 1]} : vector<16x384xf32> to vector<16x128xf32>
    %29 = vector.extract_strided_slice %26 {offsets = [0, 0], sizes = [15, 128], strides = [1, 1]} : vector<16x128xf32> to vector<15x128xf32>
    %30 = tpu.concatenate %0, %29 in 0 : vector<1x128xf32>, vector<15x128xf32> -> vector<16x128xf32>
    %31 = arith.addf %27, %30 : vector<16x128xf32>
    %32 = vector.extract_strided_slice %28 {offsets = [1, 0], sizes = [15, 128], strides = [1, 1]} : vector<16x128xf32> to vector<15x128xf32>
    %33 = tpu.concatenate %32, %0 in 0 : vector<15x128xf32>, vector<1x128xf32> -> vector<16x128xf32>
    %34 = arith.addf %31, %33 : vector<16x128xf32>
    %c0_13 = arith.constant 0 : index
    %c0_14 = arith.constant 0 : index
    %35 = vector.load %arg6[%c0_13, %c0_14] : memref<1x128xf32, #tpu.memory_space<vmem>>, vector<1x128xf32>
    %36 = vector.broadcast %35 : vector<1x128xf32> to vector<16x128xf32>
    %37 = arith.mulf %34, %36 : vector<16x128xf32>
    %c0_15 = arith.constant 0 : index
    %c0_16 = arith.constant 0 : index
    %38 = vector.load %arg7[%c0_15, %c0_16] : memref<1x128xf32, #tpu.memory_space<vmem>>, vector<1x128xf32>
    %39 = vector.broadcast %38 : vector<1x128xf32> to vector<16x128xf32>
    %40 = arith.addf %37, %39 : vector<16x128xf32>
    %41 = arith.addf %40, %2 : vector<16x128xf32>
    %cst_17 = arith.constant 0.000000e+00 : f32
    %42 = vector.broadcast %cst_17 : f32 to vector<16x128xf32>
    %43 = arith.maximumf %41, %42 : vector<16x128xf32>
    %c0_18 = arith.constant 0 : index
    %c0_19 = arith.constant 0 : index
    %c0_20 = arith.constant 0 : index
    %44 = vector.load %arg8[%c0_18, %c0_19, %c0_20] : memref<1x16x128xf32, #tpu.memory_space<vmem>>, vector<1x16x128xf32>
    %45 = vector.shape_cast %44 : vector<1x16x128xf32> to vector<16x128xf32>
    %46 = vector.shape_cast %43 : vector<16x128xf32> to vector<1x16x128xf32>
    tpu.vector_store %arg8[%c0_18, %c0_19, %c0_20], %46 {strides = array<i32>} : memref<1x16x128xf32, #tpu.memory_space<vmem>>, vector<1x16x128xf32>,
    return
  }
  func.func @transform_0(%arg0: i32) -> (i32, i32, i32) {
    %c0_i32 = arith.constant 0 : i32
    %c0_i32_0 = arith.constant 0 : i32
    %c0_i32_1 = arith.constant 0 : i32
    return %arg0, %c0_i32, %c0_i32_0 : i32, i32, i32
  }
  func.func @transform_1(%arg0: i32) -> (i32, i32) {
    %c0_i32 = arith.constant 0 : i32
    %c0_i32_0 = arith.constant 0 : i32
    %c0_i32_1 = arith.constant 0 : i32
    return %c0_i32, %c0_i32_0 : i32, i32
  }
  func.func @transform_2(%arg0: i32) -> (i32, i32) {
    %c0_i32 = arith.constant 0 : i32
    %c0_i32_0 = arith.constant 0 : i32
    %c0_i32_1 = arith.constant 0 : i32
    return %c0_i32, %c0_i32_0 : i32, i32
  }
  func.func @transform_3(%arg0: i32) -> (i32, i32) {
    %c0_i32 = arith.constant 0 : i32
    %c0_i32_0 = arith.constant 0 : i32
    %c0_i32_1 = arith.constant 0 : i32
    return %c0_i32, %c0_i32_0 : i32, i32
  }
  func.func @transform_4(%arg0: i32) -> (i32, i32) {
    %c0_i32 = arith.constant 0 : i32
    %c0_i32_0 = arith.constant 0 : i32
    %c0_i32_1 = arith.constant 0 : i32
    return %c0_i32, %c0_i32_0 : i32, i32
  }
  func.func @transform_5(%arg0: i32) -> (i32, i32) {
    %c0_i32 = arith.constant 0 : i32
    %c0_i32_0 = arith.constant 0 : i32
    %c0_i32_1 = arith.constant 0 : i32
    return %c0_i32, %c0_i32_0 : i32, i32
  }
  func.func @transform_6(%arg0: i32) -> (i32, i32) {
    %c0_i32 = arith.constant 0 : i32
    %c0_i32_0 = arith.constant 0 : i32
    %c0_i32_1 = arith.constant 0 : i32
    return %c0_i32, %c0_i32_0 : i32, i32
  }
  func.func @transform_7(%arg0: i32) -> (i32, i32, i32) {
    %c0_i32 = arith.constant 0 : i32
    %c0_i32_0 = arith.constant 0 : i32
    %c0_i32_1 = arith.constant 0 : i32
    return %arg0, %c0_i32, %c0_i32_0 : i32, i32, i32
  }
}

</mosaic_0001>

<llo_original>
// kernel: tile.23
$region0: #{tile.23}
  #allocation0 [shape = 's32[1]{0}', space=sflag, size = 0x4, scoped, tag = 'scoped memory for tile.23']
  %s0 = inlined_call_operand.vmem [shape: f32[8], index: 0, kind: input, shape index: {}]
  %s1 = inlined_call_operand.vmem [shape: f32[16,8], index: 1, kind: output, shape index: {}]
  // Predicated region
  $region2: #{tile.23} parent=0 // pred_check
    _
  $region3: #{tile.23} parent=0 // pred_check_branch
    %3 = sbr.rel (0) target = $region5
  $region4: #{tile.23} parent=0 // pred_region
    _
  $region5: #{tile.23} parent=0 // pred_fallthru
    _
  %v4 = vld [vmem:[%s0] ss:$0 sm:$0xff]
  %5 = vst [vmem:[%s1] sm:$0xff] %v4
  %s6 = scalar_lea.vmem %s1, 8
  %7 = vst [vmem:[%s6] sm:$0xff] %v4

// kernel: tile.24
$region0: #{tile.24}
  %s0 = inlined_call_operand.vmem [shape: f32[16,8], index: 0, kind: input, shape index: {}]
  %s1 = inlined_call_operand.vmem [shape: f32[1,128], index: 1, kind: output, shape index: {}]
  $region1: #{tile.24} parent=0
    #allocation0 [shape = 'u8[4096]{0}', space=vmem, size = 0x1000, scoped, tag = 'scoped mem for output reshape']
    %v2 = vld [vmem:[%s0] sm:$0x1]
    %vm3 = vcmask 64512
    %4 = vst.msk [vmem:[#allocation0] sm:$0x1] %vm3, %v2
    %s5 = scalar_lea.vmem %s0, 15
    %v6 = vld [vmem:[%s5] sm:$0x1]
    %7 = vrot.lane.b32.xlu0 %v6, 120
    %v8 = vpop.permute.xlu0 %7
    %vm9 = vcmask 1048512
    %10 = vst.msk [vmem:[#allocation0] sm:$0x1] %vm9, %v8
    %s11 = scalar_lea.vmem %s0, 14
    %v12 = vld [vmem:[%s11] sm:$0x1]
    %13 = vrot.lane.b32.xlu0 %v12, 112
    %v14 = vpop.permute.xlu0 %13
    %vm15 = vcmask 982912
    %16 = vst.msk [vmem:[#allocation0] sm:$0x1] %vm15, %v14
    %s17 = scalar_lea.vmem %s0, 13
    %v18 = vld [vmem:[%s17] sm:$0x1]
    %19 = vrot.lane.b32.xlu0 %v18, 104
    %v20 = vpop.permute.xlu0 %19
    %vm21 = vcmask 917312
    %22 = vst.msk [vmem:[#allocation0] sm:$0x1] %vm21, %v20
    %s23 = scalar_lea.vmem %s0, 12
    %v24 = vld [vmem:[%s23] sm:$0x1]
    %25 = vrot.lane.b32.xlu0 %v24, 96
    %v26 = vpop.permute.xlu0 %25
    %vm27 = vcmask 851712
    %28 = vst.msk [vmem:[#allocation0] sm:$0x1] %vm27, %v26
    %s29 = scalar_lea.vmem %s0, 11
    %v30 = vld [vmem:[%s29] sm:$0x1]
    %31 = vrot.lane.b32.xlu0 %v30, 88
    %v32 = vpop.permute.xlu0 %31
    %vm33 = vcmask 786112
    %34 = vst.msk [vmem:[#allocation0] sm:$0x1] %vm33, %v32
    %s35 = scalar_lea.vmem %s0, 10
    %v36 = vld [vmem:[%s35] sm:$0x1]
    %37 = vrot.lane.b32.xlu0 %v36, 80
    %v38 = vpop.permute.xlu0 %37
    %vm39 = vcmask 720512
    %40 = vst.msk [vmem:[#allocation0] sm:$0x1] %vm39, %v38
    %s41 = scalar_lea.vmem %s0, 9
    %v42 = vld [vmem:[%s41] sm:$0x1]
    %43 = vrot.lane.b32.xlu0 %v42, 72
    %v44 = vpop.permute.xlu0 %43
    %vm45 = vcmask 654912
    %46 = vst.msk [vmem:[#allocation0] sm:$0x1] %vm45, %v44
    %s47 = scalar_lea.vmem %s0, 8
    %v48 = vld [vmem:[%s47] sm:$0x1]
    %49 = vrot.lane.b32.xlu0 %v48, 64
    %v50 = vpop.permute.xlu0 %49
    %vm51 = vcmask 589312
    %52 = vst.msk [vmem:[#allocation0] sm:$0x1] %vm51, %v50
    %s53 = scalar_lea.vmem %s0, 7
    %v54 = vld [vmem:[%s53] sm:$0x1]
    %55 = vrot.lane.b32.xlu0 %v54, 56
    %v56 = vpop.permute.xlu0 %55
    %vm57 = vcmask 523712
    %58 = vst.msk [vmem:[#allocation0] sm:$0x1] %vm57, %v56
    %s59 = scalar_lea.vmem %s0, 6
    %v60 = vld [vmem:[%s59] sm:$0x1]
    %61 = vrot.lane.b32.xlu0 %v60, 48
    %v62 = vpop.permute.xlu0 %61
    %vm63 = vcmask 458112
    %64 = vst.msk [vmem:[#allocation0] sm:$0x1] %vm63, %v62
    %s65 = scalar_lea.vmem %s0, 5
    %v66 = vld [vmem:[%s65] sm:$0x1]
    %67 = vrot.lane.b32.xlu0 %v66, 40
    %v68 = vpop.permute.xlu0 %67
    %vm69 = vcmask 392512
    %70 = vst.msk [vmem:[#allocation0] sm:$0x1] %vm69, %v68
    %s71 = scalar_lea.vmem %s0, 4
    %v72 = vld [vmem:[%s71] sm:$0x1]
    %73 = vrot.lane.b32.xlu0 %v72, 32
    %v74 = vpop.permute.xlu0 %73
    %vm75 = vcmask 326912
    %76 = vst.msk [vmem:[#allocation0] sm:$0x1] %vm75, %v74
    %s77 = scalar_lea.vmem %s0, 3
    %v78 = vld [vmem:[%s77] sm:$0x1]
    %79 = vrot.lane.b32.xlu0 %v78, 24
    %v80 = vpop.permute.xlu0 %79
    %vm81 = vcmask 261312
    %82 = vst.msk [vmem:[#allocation0] sm:$0x1] %vm81, %v80
    %s83 = scalar_lea.vmem %s0, 2
    %v84 = vld [vmem:[%s83] sm:$0x1]
    %85 = vrot.lane.b32.xlu0 %v84, 16
    %v86 = vpop.permute.xlu0 %85
    %vm87 = vcmask 195712
    %88 = vst.msk [vmem:[#allocation0] sm:$0x1] %vm87, %v86
    %s89 = scalar_lea.vmem %s0, 1
    %v90 = vld [vmem:[%s89] sm:$0x1]
    %91 = vrot.lane.b32.xlu0 %v90, 8
    %v92 = vpop.permute.xlu0 %91
    %vm93 = vcmask 130112
    %94 = vst.msk [vmem:[#allocation0] sm:$0x1] %vm93, %v92
    %s96 = sshllo.u32 0, 1
    %v98 = vld [vmem:[#allocation0] sm:%s96]
    %s99 = sshllo.u32 0, 1
    %100 = vst [vmem:[%s1] sm:%s99] %v98

// kernel: basic_block_forward.1
$region0: #{basic_block_forward.1}
  #allocation0 [shape = 'u32[]', space=smem, size = 0x4, offset = 0x4, fixed_abs, tag = 'smem constant byte address 0x4 - core index']
  #allocation1 [shape = 'u32[144,128]{1,0:T(1,128)}', space=vmem, size = 0x12000, scoped, tag = 'internal scratch']
  %s0 = inlined_call_operand.vmem [shape: f32[2,16,128], index: 0, kind: input, shape index: {}]
  %s1 = inlined_call_operand.vmem [shape: bf16[128,384], index: 1, kind: input, shape index: {}]
  %s2 = inlined_call_operand.vmem [shape: f32[1,128], index: 2, kind: input, shape index: {}]
  %s3 = inlined_call_operand.vmem [shape: f32[1,128], index: 3, kind: input, shape index: {}]
  %s4 = inlined_call_operand.vmem [shape: bf16[128,384], index: 4, kind: input, shape index: {}]
  %s5 = inlined_call_operand.vmem [shape: f32[1,128], index: 5, kind: input, shape index: {}]
  %s6 = inlined_call_operand.vmem [shape: f32[1,128], index: 6, kind: input, shape index: {}]
  %s7 = inlined_call_operand.vmem [shape: f32[2,16,128], index: 7, kind: output, shape index: {}]
  %s8 = sld [smem:[#allocation0]]
  $region61: #{basic_block_forward.1} parent=0
    _
  %s10 = ssub.s32 1, %s8
  %s11 = scalar_select 0, %s10, %s8
  loop: start=0, step=1, limit=4
  $region2: #{basic_block_forward.1} parent=0 // loop_pre_header
    _
  $region3: #{basic_block_forward.1} parent=0 // loop_header
    %s13 = sphi 0, %s17
    %p14 = scmp.ge.s32.totalorder %s13, 4
    %s23 = sphi 0, %s25
    %s26 = sphi 0, %s23
    %s27 = sphi 0, %s26
    %s43 = sphi 0, %s27
    %s47 = sphi 0, %s47
    %s49 = sphi 0, %s47
    %s50 = sphi 0, %s49
    %s64 = sphi 0, %s50
    %s68 = sphi 0, %s68
    %s70 = sphi 0, %s68
    %s71 = sphi 0, %s70
    %s85 = sphi 0, %s71
    %s89 = sphi 0, %s89
    %s91 = sphi 0, %s89
    %s92 = sphi 0, %s91
    %s106 = sphi 0, %s92
    %s110 = sphi 0, %s110
    %s112 = sphi 0, %s110
    %s113 = sphi 0, %s112
    %s127 = sphi 0, %s113
    %s131 = sphi 0, %s131
    %s133 = sphi 0, %s131
    %s134 = sphi 0, %s133
    %s148 = sphi 0, %s134
    %s152 = sphi 0, %s152
    %s154 = sphi 0, %s152
    %s155 = sphi 0, %s154
    %s169 = sphi 0, %s155
    %s175 = sphi 0, %s177
    %s178 = sphi 0, %s175
    %s179 = sphi 0, %s178
    %s195 = sphi 0, %s179
  $region4: #{basic_block_forward.1} parent=0 // loop_header_branch
    %16 = sbr.rel (%p14) target = $region8
  $region5: #{basic_block_forward.1} parent=0 // loop_body
    %s18 = ssub.s32 %s13, 1
    %s19 = ssub.s32 %s13, 2
    %s20 = sadd.s32 %s13, 1
    %s21 = ssub.s32 %s13, %s20
    %p22 = scmp.eq.s32.totalorder %s21, 0
    %s24 = sadd.s32 %s23, 1
    %s25 = scalar_select %p22, %s23, %s24
    %p28 = pneg %p22
    %p29 = scmp.eq.s32.totalorder %s13, 1
    %p30 = por %p28, %p29
    %p31 = scmp.ne.s32.totalorder %s23, %s26
    %p32 = scmp.eq.s32.totalorder %s13, 0
    %p33 = por %p31, %p32
    %p34 = scmp.ne.s32.totalorder %s23, %s26
    %p35 = scmp.eq.s32.totalorder %s18, 1
    %p36 = por %p34, %p35
    %p37 = scmp.ne.s32.totalorder %s26, %s27
    %p38 = scmp.eq.s32.totalorder %s18, 0
    %p39 = por %p37, %p38
    %p40 = scmp.ne.s32.totalorder %s26, %s27
    %p41 = scmp.eq.s32.totalorder %s19, 1
    %p42 = por %p40, %p41
    %p44 = scmp.ne.s32.totalorder %s27, %s43
    %p45 = scmp.eq.s32.totalorder %s19, 0
    %p46 = por %p44, %p45
    %s48 = sadd.s32 %s47, 1
    %p51 = scmp.eq.s32.totalorder %s13, 1
    %p52 = scmp.ne.s32.totalorder %s47, %s49
    %p53 = scmp.eq.s32.totalorder %s13, 0
    %p54 = por %p52, %p53
    %p55 = scmp.ne.s32.totalorder %s47, %s49
    %p56 = scmp.eq.s32.totalorder %s18, 1
    %p57 = por %p55, %p56
    %p58 = scmp.ne.s32.totalorder %s49, %s50
    %p59 = scmp.eq.s32.totalorder %s18, 0
    %p60 = por %p58, %p59
    %p61 = scmp.ne.s32.totalorder %s49, %s50
    %p62 = scmp.eq.s32.totalorder %s19, 1
    %p63 = por %p61, %p62
    %p65 = scmp.ne.s32.totalorder %s50, %s64
    %p66 = scmp.eq.s32.totalorder %s19, 0
    %p67 = por %p65, %p66
    %s69 = sadd.s32 %s68, 1
    %p72 = scmp.eq.s32.totalorder %s13, 1
    %p73 = scmp.ne.s32.totalorder %s68, %s70
    %p74 = scmp.eq.s32.totalorder %s13, 0
    %p75 = por %p73, %p74
    %p76 = scmp.ne.s32.totalorder %s68, %s70
    %p77 = scmp.eq.s32.totalorder %s18, 1
    %p78 = por %p76, %p77
    %p79 = scmp.ne.s32.totalorder %s70, %s71
    %p80 = scmp.eq.s32.totalorder %s18, 0
    %p81 = por %p79, %p80
    %p82 = scmp.ne.s32.totalorder %s70, %s71
    %p83 = scmp.eq.s32.totalorder %s19, 1
    %p84 = por %p82, %p83
    %p86 = scmp.ne.s32.totalorder %s71, %s85
    %p87 = scmp.eq.s32.totalorder %s19, 0
    %p88 = por %p86, %p87
    %s90 = sadd.s32 %s89, 1
    %p93 = scmp.eq.s32.totalorder %s13, 1
    %p94 = scmp.ne.s32.totalorder %s89, %s91
    %p95 = scmp.eq.s32.totalorder %s13, 0
    %p96 = por %p94, %p95
    %p97 = scmp.ne.s32.totalorder %s89, %s91
    %p98 = scmp.eq.s32.totalorder %s18, 1
    %p99 = por %p97, %p98
    %p100 = scmp.ne.s32.totalorder %s91, %s92
    %p101 = scmp.eq.s32.totalorder %s18, 0
    %p102 = por %p100, %p101
    %p103 = scmp.ne.s32.totalorder %s91, %s92
    %p104 = scmp.eq.s32.totalorder %s19, 1
    %p105 = por %p103, %p104
    %p107 = scmp.ne.s32.totalorder %s92, %s106
    %p108 = scmp.eq.s32.totalorder %s19, 0
    %p109 = por %p107, %p108
    %s111 = sadd.s32 %s110, 1
    %p114 = scmp.eq.s32.totalorder %s13, 1
    %p115 = scmp.ne.s32.totalorder %s110, %s112
    %p116 = scmp.eq.s32.totalorder %s13, 0
    %p117 = por %p115, %p116
    %p118 = scmp.ne.s32.totalorder %s110, %s112
    %p119 = scmp.eq.s32.totalorder %s18, 1
    %p120 = por %p118, %p119
    %p121 = scmp.ne.s32.totalorder %s112, %s113
    %p122 = scmp.eq.s32.totalorder %s18, 0
    %p123 = por %p121, %p122
    %p124 = scmp.ne.s32.totalorder %s112, %s113
    %p125 = scmp.eq.s32.totalorder %s19, 1
    %p126 = por %p124, %p125
    %p128 = scmp.ne.s32.totalorder %s113, %s127
    %p129 = scmp.eq.s32.totalorder %s19, 0
    %p130 = por %p128, %p129
    %s132 = sadd.s32 %s131, 1
    %p135 = scmp.eq.s32.totalorder %s13, 1
    %p136 = scmp.ne.s32.totalorder %s131, %s133
    %p137 = scmp.eq.s32.totalorder %s13, 0
    %p138 = por %p136, %p137
    %p139 = scmp.ne.s32.totalorder %s131, %s133
    %p140 = scmp.eq.s32.totalorder %s18, 1
    %p141 = por %p139, %p140
    %p142 = scmp.ne.s32.totalorder %s133, %s134
    %p143 = scmp.eq.s32.totalorder %s18, 0
    %p144 = por %p142, %p143
    %p145 = scmp.ne.s32.totalorder %s133, %s134
    %p146 = scmp.eq.s32.totalorder %s19, 1
    %p147 = por %p145, %p146
    %p149 = scmp.ne.s32.totalorder %s134, %s148
    %p150 = scmp.eq.s32.totalorder %s19, 0
    %p151 = por %p149, %p150
    %s153 = sadd.s32 %s152, 1
    %p156 = scmp.eq.s32.totalorder %s13, 1
    %p157 = scmp.ne.s32.totalorder %s152, %s154
    %p158 = scmp.eq.s32.totalorder %s13, 0
    %p159 = por %p157, %p158
    %p160 = scmp.ne.s32.totalorder %s152, %s154
    %p161 = scmp.eq.s32.totalorder %s18, 1
    %p162 = por %p160, %p161
    %p163 = scmp.ne.s32.totalorder %s154, %s155
    %p164 = scmp.eq.s32.totalorder %s18, 0
    %p165 = por %p163, %p164
    %p166 = scmp.ne.s32.totalorder %s154, %s155
    %p167 = scmp.eq.s32.totalorder %s19, 1
    %p168 = por %p166, %p167
    %p170 = scmp.ne.s32.totalorder %s155, %s169
    %p171 = scmp.eq.s32.totalorder %s19, 0
    %p172 = por %p170, %p171
    %s173 = ssub.s32 %s13, %s20
    %p174 = scmp.eq.s32.totalorder %s173, 0
    %s176 = sadd.s32 %s175, 1
    %s177 = scalar_select %p174, %s175, %s176
    %p180 = pneg %p174
    %p181 = scmp.eq.s32.totalorder %s13, 1
    %p182 = por %p180, %p181
    %p183 = scmp.ne.s32.totalorder %s175, %s178
    %p184 = scmp.eq.s32.totalorder %s13, 0
    %p185 = por %p183, %p184
    %p186 = scmp.ne.s32.totalorder %s175, %s178
    %p187 = scmp.eq.s32.totalorder %s18, 1
    %p188 = por %p186, %p187
    %p189 = scmp.ne.s32.totalorder %s178, %s179
    %p190 = scmp.eq.s32.totalorder %s18, 0
    %p191 = por %p189, %p190
    %p192 = scmp.ne.s32.totalorder %s178, %s179
    %p193 = scmp.eq.s32.totalorder %s19, 1
    %p194 = por %p192, %p193
    %p196 = scmp.ne.s32.totalorder %s179, %s195
    %p197 = scmp.eq.s32.totalorder %s19, 0
    %p198 = por %p196, %p197
    %p199 = scmp.le.s32.totalorder 1, %s13
    %p200 = scmp.lt.s32.totalorder %s13, 3
    %p201 = pnand %p199, %p200
    %p202 = pneg %p201
    // Predicated region
    $region9: #{basic_block_forward.1} parent=5 // pred_check
      _
    $region10: #{basic_block_forward.1} parent=5 // pred_check_branch
      %204 = sbr.rel (%p201) target = $region12
    $region11: #{basic_block_forward.1} parent=5 // pred_region
      %s205 = ssub.s32 %s13, 1
      // Predicated region
      $region13: #{basic_block_forward.1} parent=11 // pred_check
        %p206 = pneg %p60
      $region14: #{basic_block_forward.1} parent=11 // pred_check_branch
        %208 = sbr.rel (%p206) target = $region16
      $region15: #{basic_block_forward.1} parent=11 // pred_region
        _
      $region16: #{basic_block_forward.1} parent=11 // pred_fallthru
        _
      // Predicated region
      $region17: #{basic_block_forward.1} parent=11 // pred_check
        %p209 = pneg %p81
      $region18: #{basic_block_forward.1} parent=11 // pred_check_branch
        %211 = sbr.rel (%p209) target = $region20
      $region19: #{basic_block_forward.1} parent=11 // pred_region
        _
      $region20: #{basic_block_forward.1} parent=11 // pred_fallthru
        _
      // Predicated region
      $region21: #{basic_block_forward.1} parent=11 // pred_check
        %p212 = pneg %p102
      $region22: #{basic_block_forward.1} parent=11 // pred_check_branch
        %214 = sbr.rel (%p212) target = $region24
      $region23: #{basic_block_forward.1} parent=11 // pred_region
        _
      $region24: #{basic_block_forward.1} parent=11 // pred_fallthru
        _
      // Predicated region
      $region25: #{basic_block_forward.1} parent=11 // pred_check
        %p215 = pneg %p123
      $region26: #{basic_block_forward.1} parent=11 // pred_check_branch
        %217 = sbr.rel (%p215) target = $region28
      $region27: #{basic_block_forward.1} parent=11 // pred_region
        _
      $region28: #{basic_block_forward.1} parent=11 // pred_fallthru
        _
      // Predicated region
      $region29: #{basic_block_forward.1} parent=11 // pred_check
        %p218 = pneg %p144
      $region30: #{basic_block_forward.1} parent=11 // pred_check_branch
        %220 = sbr.rel (%p218) target = $region32
      $region31: #{basic_block_forward.1} parent=11 // pred_region
        _
      $region32: #{basic_block_forward.1} parent=11 // pred_fallthru
        _
      // Predicated region
      $region33: #{basic_block_forward.1} parent=11 // pred_check
        %p221 = pneg %p165
      $region34: #{basic_block_forward.1} parent=11 // pred_check_branch
        %223 = sbr.rel (%p221) target = $region36
      $region35: #{basic_block_forward.1} parent=11 // pred_region
        _
      $region36: #{basic_block_forward.1} parent=11 // pred_fallthru
        _
    $region12: #{basic_block_forward.1} parent=5 // pred_fallthru
      _
    %p224 = scmp.lt.s32.totalorder %s13, 2
    // Predicated region
    $region37: #{basic_block_forward.1} parent=5 // pred_check
      %p225 = pneg %p224
    $region38: #{basic_block_forward.1} parent=5 // pred_check_branch
      %227 = sbr.rel (%p225) target = $region40
    $region39: #{basic_block_forward.1} parent=5 // pred_region
      // Predicated region
      $region41: #{basic_block_forward.1} parent=39 // pred_check
        %p228 = pneg %p33
      $region42: #{basic_block_forward.1} parent=39 // pred_check_branch
        %230 = sbr.rel (%p228) target = $region44
      $region43: #{basic_block_forward.1} parent=39 // pred_region
        %p231 = scmp.lt.s32.totalorder %s13, 1
        %s232 = scalar_select %p231, %s13, 1
        %s233 = smul.addr %s232, 2
        %s234 = smul.addr %s233, 8
        %s235 = scalar_lea.vmem %s0, %s234
      $region44: #{basic_block_forward.1} parent=39 // pred_fallthru
        _
    $region40: #{basic_block_forward.1} parent=5 // pred_fallthru
      _
    %p236 = scmp.le.s32.totalorder 1, %s13
    %p237 = scmp.lt.s32.totalorder %s13, 3
    %p238 = pnand %p236, %p237
    %p239 = pneg %p238
    // Predicated region
    $region45: #{basic_block_forward.1} parent=5 // pred_check
      _
    $region46: #{basic_block_forward.1} parent=5 // pred_check_branch
      %241 = sbr.rel (%p238) target = $region48
    $region47: #{basic_block_forward.1} parent=5 // pred_region
      %s242 = ssub.s32 %s13, 1
      %p243 = scmp.lt.s32.totalorder %s18, 1
      %s244 = scalar_select %p243, %s18, 1
      %s245 = smul.addr %s244, 2
      %s246 = smul.addr %s245, 8
      %s247 = scalar_lea.vmem %s0, %s246
      %p248 = pneg %p39
      %p249 = pneg %p36
      %p250 = pneg %p60
      %p251 = pneg %p57
      %p252 = pneg %p81
      %p253 = pneg %p78
      %p254 = pneg %p102
      %p255 = pneg %p99
      %p256 = pneg %p123
      %p257 = pneg %p120
      %p258 = pneg %p144
      %p259 = pneg %p141
      %p260 = pneg %p165
      %p261 = pneg %p162
      %p262 = pneg %p191
      %p263 = pneg %p188
      %p264 = scmp.lt.s32.totalorder %s18, 1
      %s265 = scalar_select %p264, %s18, 1
      %s266 = smul.addr %s265, 2
      %s267 = smul.addr %s266, 8
      %s268 = scalar_lea.vmem %s7, %s267
      %p269 = scmp.lt.s32.totalorder %s18, 1
      %s270 = scalar_select %p269, %s18, 1
      %s271 = smul.addr %s270, 2
      %s272 = smul.addr %s271, 8
      %s273 = scalar_lea.vmem %s0, %s272
      %p274 = scmp.lt.s32.totalorder %s18, 1
      %s275 = scalar_select %p274, %s18, 1
      %s276 = smul.addr %s275, 2
      %s277 = smul.addr %s276, 8
      %s278 = scalar_lea.vmem %s7, %s277
      %v280 = vld [vmem:[%s273] sm:$0xff]
      %v281 = vld [vmem:[%s273 + $0x8] sm:$0xff]
      %v282 = vpack.c.bf16 %v281, %v280
      %v283 = vld [vmem:[%s1] sm:$0xff]
      %v284 = vld [vmem:[%s1 + $0x8] sm:$0xf]
      %v285 = vld [vmem:[%s1 + $0xc] sm:$0xff]
      %v286 = vld [vmem:[%s1 + $0x14] sm:$0xf]
      %v287 = vld [vmem:[%s1 + $0x18] sm:$0xff]
      %v288 = vld [vmem:[%s1 + $0x20] sm:$0xf]
      %v289 = vld [vmem:[%s1 + $0x24] sm:$0xff]
      %v290 = vld [vmem:[%s1 + $0x2c] sm:$0xf]
      %v291 = vld [vmem:[%s1 + $0x30] sm:$0xff]
      %v292 = vld [vmem:[%s1 + $0x38] sm:$0xf]
      %v293 = vld [vmem:[%s1 + $0x3c] sm:$0xff]
      %v294 = vld [vmem:[%s1 + $0x44] sm:$0xf]
      %v295 = vld [vmem:[%s1 + $0x48] sm:$0xff]
      %v296 = vld [vmem:[%s1 + $0x50] sm:$0xf]
      %v297 = vld [vmem:[%s1 + $0x54] sm:$0xff]
      %v298 = vld [vmem:[%s1 + $0x5c] sm:$0xf]
      %v299 = vld [vmem:[%s1 + $0x60] sm:$0xff]
      %v300 = vld [vmem:[%s1 + $0x68] sm:$0xf]
      %v301 = vld [vmem:[%s1 + $0x6c] sm:$0xff]
      %v302 = vld [vmem:[%s1 + $0x74] sm:$0xf]
      %v303 = vld [vmem:[%s1 + $0x78] sm:$0xff]
      %v304 = vld [vmem:[%s1 + $0x80] sm:$0xf]
      %v305 = vld [vmem:[%s1 + $0x84] sm:$0xff]
      %v306 = vld [vmem:[%s1 + $0x8c] sm:$0xf]
      %v307 = vld [vmem:[%s1 + $0x90] sm:$0xff]
      %v308 = vld [vmem:[%s1 + $0x98] sm:$0xf]
      %v309 = vld [vmem:[%s1 + $0x9c] sm:$0xff]
      %v310 = vld [vmem:[%s1 + $0xa4] sm:$0xf]
      %v311 = vld [vmem:[%s1 + $0xa8] sm:$0xff]
      %v312 = vld [vmem:[%s1 + $0xb0] sm:$0xf]
      %v313 = vld [vmem:[%s1 + $0xb4] sm:$0xff]
      %v314 = vld [vmem:[%s1 + $0xbc] sm:$0xf]
      %v347 = vunpack.c.l.b16 %v283
      %v348 = vunpack.c.h.b16 %v283
      %v349 = vunpack.c.l.b16 %v284
      %v350 = vunpack.c.l.b16 %v285
      %v351 = vunpack.c.h.b16 %v285
      %v352 = vunpack.c.l.b16 %v286
      %v353 = vunpack.c.l.b16 %v287
      %v354 = vunpack.c.h.b16 %v287
      %v355 = vunpack.c.l.b16 %v288
      %v356 = vunpack.c.l.b16 %v289
      %v357 = vunpack.c.h.b16 %v289
      %v358 = vunpack.c.l.b16 %v290
      %v359 = vunpack.c.l.b16 %v291
      %v360 = vunpack.c.h.b16 %v291
      %v361 = vunpack.c.l.b16 %v292
      %v362 = vunpack.c.l.b16 %v293
      %v363 = vunpack.c.h.b16 %v293
      %v364 = vunpack.c.l.b16 %v294
      %v365 = vunpack.c.l.b16 %v295
      %v366 = vunpack.c.h.b16 %v295
      %v367 = vunpack.c.l.b16 %v296
      %v368 = vunpack.c.l.b16 %v297
      %v369 = vunpack.c.h.b16 %v297
      %v370 = vunpack.c.l.b16 %v298
      %v371 = vunpack.c.l.b16 %v299
      %v372 = vunpack.c.h.b16 %v299
      %v373 = vunpack.c.l.b16 %v300
      %v374 = vunpack.c.l.b16 %v301
      %v375 = vunpack.c.h.b16 %v301
      %v376 = vunpack.c.l.b16 %v302
      %v377 = vunpack.c.l.b16 %v303
      %v378 = vunpack.c.h.b16 %v303
      %v379 = vunpack.c.l.b16 %v304
      %v380 = vunpack.c.l.b16 %v305
      %v381 = vunpack.c.h.b16 %v305
      %v382 = vunpack.c.l.b16 %v306
      %v383 = vunpack.c.l.b16 %v307
      %v384 = vunpack.c.h.b16 %v307
      %v385 = vunpack.c.l.b16 %v308
      %v386 = vunpack.c.l.b16 %v309
      %v387 = vunpack.c.h.b16 %v309
      %v388 = vunpack.c.l.b16 %v310
      %v389 = vunpack.c.l.b16 %v311
      %v390 = vunpack.c.h.b16 %v311
      %v391 = vunpack.c.l.b16 %v312
      %v392 = vunpack.c.l.b16 %v313
      %v393 = vunpack.c.h.b16 %v313
      %v394 = vunpack.c.l.b16 %v314
      %v395 = vpack.c.b16 %v350, %v347
      %v396 = vpack.c.b16 %v351, %v348
      %v397 = vpack.c.b16 %v352, %v349
      %v398 = vpack.c.b16 %v356, %v353
      %v399 = vpack.c.b16 %v357, %v354
      %v400 = vpack.c.b16 %v358, %v355
      %v401 = vpack.c.b16 %v362, %v359
      %v402 = vpack.c.b16 %v363, %v360
      %v403 = vpack.c.b16 %v364, %v361
      %v404 = vpack.c.b16 %v368, %v365
      %v405 = vpack.c.b16 %v369, %v366
      %v406 = vpack.c.b16 %v370, %v367
      %v407 = vpack.c.b16 %v374, %v371
      %v408 = vpack.c.b16 %v375, %v372
      %v409 = vpack.c.b16 %v376, %v373
      %v410 = vpack.c.b16 %v380, %v377
      %v411 = vpack.c.b16 %v381, %v378
      %v412 = vpack.c.b16 %v382, %v379
      %v413 = vpack.c.b16 %v386, %v383
      %v414 = vpack.c.b16 %v387, %v384
      %v415 = vpack.c.b16 %v388, %v385
      %v416 = vpack.c.b16 %v392, %v389
      %v417 = vpack.c.b16 %v393, %v390
      %v418 = vpack.c.b16 %v394, %v391
      %443 = vmatprep.subr.bf16.mxu0 %v396
      %444 = vmatpush1.bf16.msra.mxu0 %v395
      %445 = vmatprep.subr.bf16.mxu0 %v399
      %446 = vmatpush1.bf16.msra.mxu0 %v398
      %447 = vmatprep.subr.bf16.mxu0 %v402
      %448 = vmatpush1.bf16.msra.mxu0 %v401
      %449 = vmatprep.subr.bf16.mxu0 %v405
      %450 = vmatpush1.bf16.msra.mxu0 %v404
      %451 = vmatprep.subr.bf16.mxu0 %v408
      %452 = vmatpush1.bf16.msra.mxu0 %v407
      %453 = vmatprep.subr.bf16.mxu0 %v411
      %454 = vmatpush1.bf16.msra.mxu0 %v410
      %455 = vmatprep.subr.bf16.mxu0 %v414
      %456 = vmatpush1.bf16.msra.mxu0 %v413
      %457 = vmatprep.subr.bf16.mxu0 %v417
      %458 = vmatpush1.bf16.msra.mxu0 %v416
      %459 = vmatprep.subr.bf16.mxu0 0
      %460 = vmatpush1.bf16.msra.mxu0 0
      %461 = vmatprep.subr.bf16.mxu0 0
      %462 = vmatpush1.bf16.msra.mxu0 0
      %463 = vmatprep.subr.bf16.mxu0 0
      %464 = vmatpush1.bf16.msra.mxu0 0
      %465 = vmatprep.subr.bf16.mxu0 0
      %466 = vmatpush1.bf16.msra.mxu0 0
      %467 = vmatprep.subr.bf16.mxu0 0
      %468 = vmatpush1.bf16.msra.mxu0 0
      %469 = vmatprep.subr.bf16.mxu0 0
      %470 = vmatpush1.bf16.msra.mxu0 0
      %471 = vmatprep.subr.bf16.mxu0 0
      %472 = vmatpush1.bf16.msra.mxu0 0
      %473 = vmatprep.subr.bf16.mxu0 0
      %474 = vmatpush1.bf16.msra.mxu0 0
      %475 = vmatprep.mubr.bf16.mxu0 0
      %476 = vmatmul.mubr.bf16.gmra.mrb[0].mxu0 %v282
      %v477 = vpop.f32.mrb[0].mxu0
      %v478 = vadd.f32 0.0, %v477
      %v479 = vpop.f32.mrb[0].mxu0
      %v480 = vadd.f32 0.0, %v479
      %v481 = vpop.f32.mrb[0].mxu0
      %v482 = vadd.f32 0.0, %v481
      %v483 = vpop.f32.mrb[0].mxu0
      %v484 = vadd.f32 0.0, %v483
      %485 = vdwg.mxu0
      %486 = vmatprep.subr.bf16.mxu0 0
      %487 = vmatpush1.bf16.msra.mxu0 %v397
      %488 = vmatprep.subr.bf16.mxu0 0
      %489 = vmatpush1.bf16.msra.mxu0 %v400
      %490 = vmatprep.subr.bf16.mxu0 0
      %491 = vmatpush1.bf16.msra.mxu0 %v403
      %492 = vmatprep.subr.bf16.mxu0 0
      %493 = vmatpush1.bf16.msra.mxu0 %v406
      %494 = vmatprep.subr.bf16.mxu0 0
      %495 = vmatpush1.bf16.msra.mxu0 %v409
      %496 = vmatprep.subr.bf16.mxu0 0
      %497 = vmatpush1.bf16.msra.mxu0 %v412
      %498 = vmatprep.subr.bf16.mxu0 0
      %499 = vmatpush1.bf16.msra.mxu0 %v415
      %500 = vmatprep.subr.bf16.mxu0 0
      %501 = vmatpush1.bf16.msra.mxu0 %v418
      %502 = vmatprep.subr.bf16.mxu0 0
      %503 = vmatpush1.bf16.msra.mxu0 0
      %504 = vmatprep.subr.bf16.mxu0 0
      %505 = vmatpush1.bf16.msra.mxu0 0
      %506 = vmatprep.subr.bf16.mxu0 0
      %507 = vmatpush1.bf16.msra.mxu0 0
      %508 = vmatprep.subr.bf16.mxu0 0
      %509 = vmatpush1.bf16.msra.mxu0 0
      %510 = vmatprep.subr.bf16.mxu0 0
      %511 = vmatpush1.bf16.msra.mxu0 0
      %512 = vmatprep.subr.bf16.mxu0 0
      %513 = vmatpush1.bf16.msra.mxu0 0
      %514 = vmatprep.subr.bf16.mxu0 0
      %515 = vmatpush1.bf16.msra.mxu0 0
      %516 = vmatprep.subr.bf16.mxu0 0
      %517 = vmatpush1.bf16.msra.mxu0 0
      %518 = vmatprep.mubr.bf16.mxu0 0
      %519 = vmatmul.mubr.bf16.gmra.mrb[0].mxu0 %v282
      %v520 = vpop.f32.mrb[0].mxu0
      %v521 = vadd.f32 0.0, %v520
      %v522 = vpop.f32.mrb[0].mxu0
      %v523 = vpop.f32.mrb[0].mxu0
      %v524 = vadd.f32 0.0, %v523
      %v525 = vpop.f32.mrb[0].mxu0
      %526 = vdwg.mxu0
      %vm529 = vcmask 1040384
      %v530 = vrot.slane %v478, 7
      %v531 = vrot.slane %v482, 7
      %v532 = vsel %vm529, %v530, %v531
      %v535 = vsel %vm529, 0.0, %v530
      %v536 = vadd.f32 %v480, %v535
      %v537 = vadd.f32 %v484, %v532
      %vm540 = vcmask 1046528
      %v541 = vrot.slane %v521, 1
      %v542 = vrot.slane %v524, 1
      %v543 = vsel %vm540, %v541, %v542
      %v546 = vsel %vm540, %v542, 0.0
      %v547 = vadd.f32 %v536, %v543
      %v548 = vadd.f32 %v537, %v546
      %v549 = vld [vmem:[%s2] sm:$0x1]
      %v551 = vlaneseq
      %v552 = vshrl.u32 %v551, 7
      %v553 = vsub.s32 0, %v552
      %v554 = vrot.slane %v549, %v553
      %v556 = vmul.f32 %v547, %v554
      %v557 = vmul.f32 %v548, %v554
      %v558 = vld [vmem:[%s3] sm:$0x1]
      %v560 = vlaneseq
      %v561 = vshrl.u32 %v560, 7
      %v562 = vsub.s32 0, %v561
      %v563 = vrot.slane %v558, %v562
      %v565 = vadd.f32 %v556, %v563
      %v566 = vadd.f32 %v557, %v563
      %v567 = vmax.f32 %v565, 0.0
      %v568 = vmax.f32 %v566, 0.0
      %v569 = vpack.c.bf16 %v568, %v567
      %v570 = vld [vmem:[%s4] sm:$0xff]
      %v571 = vld [vmem:[%s4 + $0x8] sm:$0xf]
      %v572 = vld [vmem:[%s4 + $0xc] sm:$0xff]
      %v573 = vld [vmem:[%s4 + $0x14] sm:$0xf]
      %v574 = vld [vmem:[%s4 + $0x18] sm:$0xff]
      %v575 = vld [vmem:[%s4 + $0x20] sm:$0xf]
      %v576 = vld [vmem:[%s4 + $0x24] sm:$0xff]
      %v577 = vld [vmem:[%s4 + $0x2c] sm:$0xf]
      %v578 = vld [vmem:[%s4 + $0x30] sm:$0xff]
      %v579 = vld [vmem:[%s4 + $0x38] sm:$0xf]
      %v580 = vld [vmem:[%s4 + $0x3c] sm:$0xff]
      %v581 = vld [vmem:[%s4 + $0x44] sm:$0xf]
      %v582 = vld [vmem:[%s4 + $0x48] sm:$0xff]
      %v583 = vld [vmem:[%s4 + $0x50] sm:$0xf]
      %v584 = vld [vmem:[%s4 + $0x54] sm:$0xff]
      %v585 = vld [vmem:[%s4 + $0x5c] sm:$0xf]
      %v586 = vld [vmem:[%s4 + $0x60] sm:$0xff]
      %v587 = vld [vmem:[%s4 + $0x68] sm:$0xf]
      %v588 = vld [vmem:[%s4 + $0x6c] sm:$0xff]
      %v589 = vld [vmem:[%s4 + $0x74] sm:$0xf]
      %v590 = vld [vmem:[%s4 + $0x78] sm:$0xff]
      %v591 = vld [vmem:[%s4 + $0x80] sm:$0xf]
      %v592 = vld [vmem:[%s4 + $0x84] sm:$0xff]
      %v593 = vld [vmem:[%s4 + $0x8c] sm:$0xf]
      %v594 = vld [vmem:[%s4 + $0x90] sm:$0xff]
      %v595 = vld [vmem:[%s4 + $0x98] sm:$0xf]
      %v596 = vld [vmem:[%s4 + $0x9c] sm:$0xff]
      %v597 = vld [vmem:[%s4 + $0xa4] sm:$0xf]
      %v598 = vld [vmem:[%s4 + $0xa8] sm:$0xff]
      %v599 = vld [vmem:[%s4 + $0xb0] sm:$0xf]
      %v600 = vld [vmem:[%s4 + $0xb4] sm:$0xff]
      %v601 = vld [vmem:[%s4 + $0xbc] sm:$0xf]
      %v634 = vunpack.c.l.b16 %v570
      %v635 = vunpack.c.h.b16 %v570
      %v636 = vunpack.c.l.b16 %v571
      %v637 = vunpack.c.l.b16 %v572
      %v638 = vunpack.c.h.b16 %v572
      %v639 = vunpack.c.l.b16 %v573
      %v640 = vunpack.c.l.b16 %v574
      %v641 = vunpack.c.h.b16 %v574
      %v642 = vunpack.c.l.b16 %v575
      %v643 = vunpack.c.l.b16 %v576
      %v644 = vunpack.c.h.b16 %v576
      %v645 = vunpack.c.l.b16 %v577
      %v646 = vunpack.c.l.b16 %v578
      %v647 = vunpack.c.h.b16 %v578
      %v648 = vunpack.c.l.b16 %v579
      %v649 = vunpack.c.l.b16 %v580
      %v650 = vunpack.c.h.b16 %v580
      %v651 = vunpack.c.l.b16 %v581
      %v652 = vunpack.c.l.b16 %v582
      %v653 = vunpack.c.h.b16 %v582
      %v654 = vunpack.c.l.b16 %v583
      %v655 = vunpack.c.l.b16 %v584
      %v656 = vunpack.c.h.b16 %v584
      %v657 = vunpack.c.l.b16 %v585
      %v658 = vunpack.c.l.b16 %v586
      %v659 = vunpack.c.h.b16 %v586
      %v660 = vunpack.c.l.b16 %v587
      %v661 = vunpack.c.l.b16 %v588
      %v662 = vunpack.c.h.b16 %v588
      %v663 = vunpack.c.l.b16 %v589
      %v664 = vunpack.c.l.b16 %v590
      %v665 = vunpack.c.h.b16 %v590
      %v666 = vunpack.c.l.b16 %v591
      %v667 = vunpack.c.l.b16 %v592
      %v668 = vunpack.c.h.b16 %v592
      %v669 = vunpack.c.l.b16 %v593
      %v670 = vunpack.c.l.b16 %v594
      %v671 = vunpack.c.h.b16 %v594
      %v672 = vunpack.c.l.b16 %v595
      %v673 = vunpack.c.l.b16 %v596
      %v674 = vunpack.c.h.b16 %v596
      %v675 = vunpack.c.l.b16 %v597
      %v676 = vunpack.c.l.b16 %v598
      %v677 = vunpack.c.h.b16 %v598
      %v678 = vunpack.c.l.b16 %v599
      %v679 = vunpack.c.l.b16 %v600
      %v680 = vunpack.c.h.b16 %v600
      %v681 = vunpack.c.l.b16 %v601
      %v682 = vpack.c.b16 %v637, %v634
      %v683 = vpack.c.b16 %v638, %v635
      %v684 = vpack.c.b16 %v639, %v636
      %v685 = vpack.c.b16 %v643, %v640
      %v686 = vpack.c.b16 %v644, %v641
      %v687 = vpack.c.b16 %v645, %v642
      %v688 = vpack.c.b16 %v649, %v646
      %v689 = vpack.c.b16 %v650, %v647
      %v690 = vpack.c.b16 %v651, %v648
      %v691 = vpack.c.b16 %v655, %v652
      %v692 = vpack.c.b16 %v656, %v653
      %v693 = vpack.c.b16 %v657, %v654
      %v694 = vpack.c.b16 %v661, %v658
      %v695 = vpack.c.b16 %v662, %v659
      %v696 = vpack.c.b16 %v663, %v660
      %v697 = vpack.c.b16 %v667, %v664
      %v698 = vpack.c.b16 %v668, %v665
      %v699 = vpack.c.b16 %v669, %v666
      %v700 = vpack.c.b16 %v673, %v670
      %v701 = vpack.c.b16 %v674, %v671
      %v702 = vpack.c.b16 %v675, %v672
      %v703 = vpack.c.b16 %v679, %v676
      %v704 = vpack.c.b16 %v680, %v677
      %v705 = vpack.c.b16 %v681, %v678
      %730 = vmatprep.subr.bf16.mxu0 %v683
      %731 = vmatpush1.bf16.msra.mxu0 %v682
      %732 = vmatprep.subr.bf16.mxu0 %v686
      %733 = vmatpush1.bf16.msra.mxu0 %v685
      %734 = vmatprep.subr.bf16.mxu0 %v689
      %735 = vmatpush1.bf16.msra.mxu0 %v688
      %736 = vmatprep.subr.bf16.mxu0 %v692
      %737 = vmatpush1.bf16.msra.mxu0 %v691
      %738 = vmatprep.subr.bf16.mxu0 %v695
      %739 = vmatpush1.bf16.msra.mxu0 %v694
      %740 = vmatprep.subr.bf16.mxu0 %v698
      %741 = vmatpush1.bf16.msra.mxu0 %v697
      %742 = vmatprep.subr.bf16.mxu0 %v701
      %743 = vmatpush1.bf16.msra.mxu0 %v700
      %744 = vmatprep.subr.bf16.mxu0 %v704
      %745 = vmatpush1.bf16.msra.mxu0 %v703
      %746 = vmatprep.subr.bf16.mxu0 0
      %747 = vmatpush1.bf16.msra.mxu0 0
      %748 = vmatprep.subr.bf16.mxu0 0
      %749 = vmatpush1.bf16.msra.mxu0 0
      %750 = vmatprep.subr.bf16.mxu0 0
      %751 = vmatpush1.bf16.msra.mxu0 0
      %752 = vmatprep.subr.bf16.mxu0 0
      %753 = vmatpush1.bf16.msra.mxu0 0
      %754 = vmatprep.subr.bf16.mxu0 0
      %755 = vmatpush1.bf16.msra.mxu0 0
      %756 = vmatprep.subr.bf16.mxu0 0
      %757 = vmatpush1.bf16.msra.mxu0 0
      %758 = vmatprep.subr.bf16.mxu0 0
      %759 = vmatpush1.bf16.msra.mxu0 0
      %760 = vmatprep.subr.bf16.mxu0 0
      %761 = vmatpush1.bf16.msra.mxu0 0
      %762 = vmatprep.mubr.bf16.mxu0 0
      %763 = vmatmul.mubr.bf16.gmra.mrb[0].mxu0 %v569
      %v764 = vpop.f32.mrb[0].mxu0
      %v765 = vadd.f32 0.0, %v764
      %v766 = vpop.f32.mrb[0].mxu0
      %v767 = vadd.f32 0.0, %v766
      %v768 = vpop.f32.mrb[0].mxu0
      %v769 = vadd.f32 0.0, %v768
      %v770 = vpop.f32.mrb[0].mxu0
      %v771 = vadd.f32 0.0, %v770
      %772 = vdwg.mxu0
      %773 = vmatprep.subr.bf16.mxu0 0
      %774 = vmatpush1.bf16.msra.mxu0 %v684
      %775 = vmatprep.subr.bf16.mxu0 0
      %776 = vmatpush1.bf16.msra.mxu0 %v687
      %777 = vmatprep.subr.bf16.mxu0 0
      %778 = vmatpush1.bf16.msra.mxu0 %v690
      %779 = vmatprep.subr.bf16.mxu0 0
      %780 = vmatpush1.bf16.msra.mxu0 %v693
      %781 = vmatprep.subr.bf16.mxu0 0
      %782 = vmatpush1.bf16.msra.mxu0 %v696
      %783 = vmatprep.subr.bf16.mxu0 0
      %784 = vmatpush1.bf16.msra.mxu0 %v699
      %785 = vmatprep.subr.bf16.mxu0 0
      %786 = vmatpush1.bf16.msra.mxu0 %v702
      %787 = vmatprep.subr.bf16.mxu0 0
      %788 = vmatpush1.bf16.msra.mxu0 %v705
      %789 = vmatprep.subr.bf16.mxu0 0
      %790 = vmatpush1.bf16.msra.mxu0 0
      %791 = vmatprep.subr.bf16.mxu0 0
      %792 = vmatpush1.bf16.msra.mxu0 0
      %793 = vmatprep.subr.bf16.mxu0 0
      %794 = vmatpush1.bf16.msra.mxu0 0
      %795 = vmatprep.subr.bf16.mxu0 0
      %796 = vmatpush1.bf16.msra.mxu0 0
      %797 = vmatprep.subr.bf16.mxu0 0
      %798 = vmatpush1.bf16.msra.mxu0 0
      %799 = vmatprep.subr.bf16.mxu0 0
      %800 = vmatpush1.bf16.msra.mxu0 0
      %801 = vmatprep.subr.bf16.mxu0 0
      %802 = vmatpush1.bf16.msra.mxu0 0
      %803 = vmatprep.subr.bf16.mxu0 0
      %804 = vmatpush1.bf16.msra.mxu0 0
      %805 = vmatprep.mubr.bf16.mxu0 0
      %806 = vmatmul.mubr.bf16.gmra.mrb[0].mxu0 %v569
      %v807 = vpop.f32.mrb[0].mxu0
      %v808 = vadd.f32 0.0, %v807
      %v809 = vpop.f32.mrb[0].mxu0
      %v810 = vpop.f32.mrb[0].mxu0
      %v811 = vadd.f32 0.0, %v810
      %v812 = vpop.f32.mrb[0].mxu0
      %813 = vdwg.mxu0
      %v816 = vrot.slane %v765, 7
      %v817 = vrot.slane %v769, 7
      %v818 = vsel %vm529, %v816, %v817
      %v821 = vsel %vm529, 0.0, %v816
      %v822 = vadd.f32 %v767, %v821
      %v823 = vadd.f32 %v771, %v818
      %v826 = vrot.slane %v808, 1
      %v827 = vrot.slane %v811, 1
      %v828 = vsel %vm540, %v826, %v827
      %v831 = vsel %vm540, %v827, 0.0
      %v832 = vadd.f32 %v822, %v828
      %v833 = vadd.f32 %v823, %v831
      %v834 = vld [vmem:[%s5] sm:$0x1]
      %v836 = vlaneseq
      %v837 = vshrl.u32 %v836, 7
      %v838 = vsub.s32 0, %v837
      %v839 = vrot.slane %v834, %v838
      %v841 = vmul.f32 %v832, %v839
      %v842 = vmul.f32 %v833, %v839
      %v843 = vld [vmem:[%s6] sm:$0x1]
      %v845 = vlaneseq
      %v846 = vshrl.u32 %v845, 7
      %v847 = vsub.s32 0, %v846
      %v848 = vrot.slane %v843, %v847
      %v850 = vadd.f32 %v841, %v848
      %v851 = vadd.f32 %v842, %v848
      %v852 = vadd.f32 %v850, %v280
      %v853 = vadd.f32 %v851, %v281
      %v854 = vmax.f32 %v852, 0.0
      %v855 = vmax.f32 %v853, 0.0
      %856 = vst [vmem:[%s278] sm:$0xff] %v854
      %857 = vst [vmem:[%s278 + $0x8] sm:$0xff] %v855
      %p858 = scmp.lt.s32.totalorder %s18, 1
      %s859 = scalar_select %p858, %s18, 1
      %s860 = smul.addr %s859, 2
      %s861 = smul.addr %s860, 8
      %s862 = scalar_lea.vmem %s7, %s861
      // Predicated region
      $region49: #{basic_block_forward.1} parent=47 // pred_check
        %p863 = pneg %p188
      $region50: #{basic_block_forward.1} parent=47 // pred_check_branch
        %865 = sbr.rel (%p863) target = $region52
      $region51: #{basic_block_forward.1} parent=47 // pred_region
        _
      $region52: #{basic_block_forward.1} parent=47 // pred_fallthru
        _
    $region48: #{basic_block_forward.1} parent=5 // pred_fallthru
      _
    %p866 = scmp.le.s32.totalorder 2, %s13
    // Predicated region
    $region53: #{basic_block_forward.1} parent=5 // pred_check
      %p867 = pneg %p866
    $region54: #{basic_block_forward.1} parent=5 // pred_check_branch
      %869 = sbr.rel (%p867) target = $region56
    $region55: #{basic_block_forward.1} parent=5 // pred_region
      %s870 = ssub.s32 %s13, 2
      // Predicated region
      $region57: #{basic_block_forward.1} parent=55 // pred_check
        %p871 = pneg %p194
      $region58: #{basic_block_forward.1} parent=55 // pred_check_branch
        %873 = sbr.rel (%p871) target = $region60
      $region59: #{basic_block_forward.1} parent=55 // pred_region
        %p874 = scmp.lt.s32.totalorder %s19, 1
        %s875 = scalar_select %p874, %s19, 1
        %s876 = smul.addr %s875, 2
        %s877 = smul.addr %s876, 8
        %s878 = scalar_lea.vmem %s7, %s877
      $region60: #{basic_block_forward.1} parent=55 // pred_fallthru
        _
    $region56: #{basic_block_forward.1} parent=5 // pred_fallthru
      _
  $region6: #{basic_block_forward.1} parent=0 // loop_footer
    %s17 = sadd.s32 1, %s13
  $region7: #{basic_block_forward.1} parent=0 // loop_footer_branch
    %12 = sbr.rel target = $region3
  $region8: #{basic_block_forward.1} parent=0 // loop_exit
    _

</llo_original>
